<compile_context>
chip_gen: v6e
topology: v6e:2x2x1
jax: 0.10.0
libtpu: 0.0.40
codegen_flags: <defaults>
</compile_context>

<pallas_src>
import jax
import jax.numpy as jnp
from jax.experimental import pallas as pl
from jax.experimental.pallas import tpu as pltpu


def _round_up(x, m):
    return (x + m - 1) // m * m


def _cdiv(a, b):
    return (a + b - 1) // b


def _classifier_kernel(x_ref, w1_ref, shift_ref, w2_ref, b2_ref, o_ref):
    """One batch tile.

    x:     (TB, IN)  streamed per grid step (auto double-buffered)
    w1:    (IN, D)   BN scale folded into columns; VMEM-resident
    shift: (1, D)    b1*scale + (beta - mean*scale); resident
    w2:    (1, D)    output-layer weight as a row; resident
    b2:    (1, 1)    output-layer bias; resident
    o:     (1, TB)   lane-dense output row for this tile
    """
    # dense1: Linear (+ folded BatchNorm1d eval-mode affine), f32 accumulation.
    h = jnp.dot(x_ref[...], w1_ref[...], preferred_element_type=jnp.float32)
    h = h + shift_ref[...]

    # dense1: LeakyReLU(negative_slope=0.1)
    h = jnp.maximum(h, 0.1 * h)

    # dense1: Dropout(p=0.2) -> identity in eval mode
    # TODO(synk): training-mode dropout (pltpu.prng_*) not implemented; eval semantics used.

    # output_layer: Linear(D -> 1). Transposed contraction: (1, D) . (TB, D)^T -> (1, TB),
    # so the MXU consumes h's transpose directly (no materialized XLU transpose) and the
    # result is already a lane-dense row.
    out = jax.lax.dot_general(
        w2_ref[...], h,
        dimension_numbers=(((1,), (1,)), ((), ())),
        preferred_element_type=jnp.float32) + b2_ref[...]
    o_ref[...] = out.astype(o_ref.dtype)


def binary_classifier_forward(embedding, params, *, block_b=None,
                              stream_dtype=jnp.bfloat16):
    """Fused classifier forward. Returns shape (B,), matching x.squeeze(1).

    block_b:      optional extra cap on the batch tile size (rounded to 128).
    stream_dtype: dtype used to stream the embedding and w1 (default bf16 to halve
                  HBM traffic; matmuls still accumulate in f32). Pass None to stream
                  in the embedding's own dtype (avoids a wrapper-side cast pass when
                  the input is f32 and exact f32 results are required).
    """
    B, IN = embedding.shape
    D = params["w1"].shape[1]
    assert params["w1"].shape[0] == IN

    # Fold BatchNorm1d running stats + first Linear bias into the weights:
    #   ((x @ w1 + b1) - mean) * gamma/sqrt(var+eps) + beta
    #     == x @ (w1 * scale) + (b1 * scale + beta - mean * scale)
    eps = 1e-5
    inv_std = jax.lax.rsqrt(params["bn_var"].astype(jnp.float32) + eps)
    scale = params["bn_gamma"].astype(jnp.float32) * inv_std               # (D,)
    shift = params["bn_beta"].astype(jnp.float32) - params["bn_mean"] * scale
    w1_eff = params["w1"].astype(jnp.float32) * scale[None, :]             # (IN, D)
    shift_eff = (params["b1"] * scale + shift).reshape(1, D).astype(jnp.float32)
    w2_row = params["w2"].reshape(1, D).astype(jnp.float32)                # (1, D)
    b2 = params["b2"].reshape(1, 1).astype(jnp.float32)                    # (1, 1)

    if stream_dtype is None:
        stream_dtype = embedding.dtype
    x = embedding.astype(stream_dtype)
    w1_eff = w1_eff.astype(stream_dtype)
    in_bytes = jnp.dtype(stream_dtype).itemsize

    # ---- batch tile selection ------------------------------------------------
    # Rough per-row / resident VMEM footprint (generous):
    #   x double-buffered + f32 h intermediate (x2) + (1, TB) f32 out double-buffered
    per_row_bytes = 2 * IN * in_bytes + 2 * D * 4 + 2 * 4
    resident_bytes = 2 * IN * D * in_bytes + 8 * D * 4 + 1024
    VMEM_BUDGET = 40 << 20          # conservative: fits v7x's 64 MiB physical VMEM
    TARGET_TILE_BYTES = 2 << 20     # >= ~1-2 MB of x per grid step

    SMALL_BATCH = 256
    if B <= SMALL_BATCH:
        # Tiny batch: single full-array tile; only a round-up-to-8 pad (cheap).
        TB = _round_up(B, 8)
        if TB != B:
            x = jnp.pad(x, ((0, TB - B), (0, 0)))
        num_tiles = 1
        out_cols = TB
    else:
        tb_vmem = max(128, (VMEM_BUDGET - resident_bytes) // per_row_bytes // 128 * 128)
        tb_target = max(128, TARGET_TILE_BYTES // (IN * in_bytes) // 128 * 128)
        # Keep >= ~4 tiles when the batch allows (2 per TensorCore on v7x).
        tb_tiles = max(128, _round_up(_cdiv(B, 4), 128))
        TB = min(tb_vmem, tb_target, tb_tiles)
        if block_b is not None:
            TB = min(TB, max(128, block_b // 128 * 128))
        num_tiles = _cdiv(B, TB)     # no padding: Pallas masks the partial last block
        out_cols = B

    footprint = TB * per_row_bytes + resident_bytes
    vmem_limit = int(min(56 << 20, max(32 << 20, footprint + (8 << 20))))

    out = pl.pallas_call(
        _classifier_kernel,
        out_shape=jax.ShapeDtypeStruct((1, out_cols), jnp.float32),
        grid_spec=pl.GridSpec(
            grid=(num_tiles,),
            in_specs=[
                # streamed batch tile (auto double-buffered)
                pl.BlockSpec((TB, IN), lambda i: (i, 0)),
                # weights / biases: constant block index -> fetched once, resident
                pl.BlockSpec((IN, D), lambda i: (0, 0)),
                pl.BlockSpec((1, D), lambda i: (0, 0)),
                pl.BlockSpec((1, D), lambda i: (0, 0)),
                pl.BlockSpec((1, 1), lambda i: (0, 0)),
            ],
            out_specs=pl.BlockSpec((1, TB), lambda i: (0, i)),
        ),
        compiler_params=pltpu.CompilerParams(
            dimension_semantics=("parallel",),
            vmem_limit_bytes=vmem_limit),
    )(x, w1_eff, shift_eff, w2_row, b2)

    return out.reshape(out_cols)[:B]


def init_params(key, in_shape, dense_shape):
    k1, k2, k3, k4, k5, k6 = jax.random.split(key, 6)
    # weights stored as (in, out) (transposed vs. PyTorch's (out, in))
    w1 = jax.random.normal(k1, (in_shape, dense_shape), jnp.float32) * 0.05
    b1 = jax.random.normal(k2, (dense_shape,), jnp.float32) * 0.05
    w2 = jax.random.normal(k3, (dense_shape, 1), jnp.float32) * 0.05
    b2 = jax.random.normal(k4, (1,), jnp.float32) * 0.05
    bn_gamma = 1.0 + 0.1 * jax.random.normal(k5, (dense_shape,), jnp.float32)
    bn_beta = 0.1 * jax.random.normal(k6, (dense_shape,), jnp.float32)
    bn_mean = jnp.zeros((dense_shape,), jnp.float32)
    bn_var = jnp.ones((dense_shape,), jnp.float32)
    return dict(w1=w1, b1=b1, w2=w2, b2=b2,
                bn_gamma=bn_gamma, bn_beta=bn_beta,
                bn_mean=bn_mean, bn_var=bn_var)


def reference_forward(embedding, params):
    eps = 1e-5
    h = embedding @ params["w1"] + params["b1"]
    h = (h - params["bn_mean"]) / jnp.sqrt(params["bn_var"] + eps)
    h = h * params["bn_gamma"] + params["bn_beta"]
    h = jnp.where(h >= 0.0, h, 0.1 * h)       # LeakyReLU(negative_slope=0.1)
    out = h @ params["w2"] + params["b2"]
    return out[:, 0]


if __name__ == "__main__":
    IN, D = 32, 64
    key = jax.random.PRNGKey(0)
    kx1, kx2, kp = jax.random.split(key, 3)
    params = init_params(kp, IN, D)

    # Case 1: tiny ragged batch (single-tile path + round-up-to-8 pad), bf16 streaming.
    B1 = 10
    emb1 = jax.random.normal(kx1, (B1, IN), jnp.float32)
    out1 = jax.block_until_ready(binary_classifier_forward(emb1, params))
    ref1 = reference_forward(emb1, params)
    assert out1.shape == (B1,)
    assert jnp.allclose(out1, ref1, atol=2e-2, rtol=2e-2), (out1, ref1)

    # Case 2: multi-tile batch, B not a multiple of the tile -> exercises the
    # un-padded partial-last-block (masked OOB write) path. bf16 streaming.
    B2 = 300
    emb2 = jax.random.normal(kx2, (B2, IN), jnp.float32)
    out2 = jax.block_until_ready(binary_classifier_forward(emb2, params))
    ref2 = reference_forward(emb2, params)
    assert out2.shape == (B2,)
    assert jnp.allclose(out2, ref2, atol=2e-2, rtol=2e-2), (out2, ref2)

    # Case 3: same multi-tile batch with f32 streaming -> exact-path tolerance check.
    out3 = jax.block_until_ready(
        binary_classifier_forward(emb2, params, stream_dtype=jnp.float32))
    assert jnp.allclose(out3, ref2, atol=1e-4, rtol=1e-4), (out3, ref2)

    print("KERNEL_OK")
</pallas_src>

<mosaic_0001>
module attributes {stable_mosaic.version = 11 : i64} {
  func.func @_classifier_kernel(%arg0: i32, %arg1: memref<16x32xbf16, #tpu.memory_space<vmem>>, %arg2: memref<32x64xbf16, #tpu.memory_space<vmem>>, %arg3: memref<1x64xf32, #tpu.memory_space<vmem>>, %arg4: memref<1x64xf32, #tpu.memory_space<vmem>>, %arg5: memref<1x1xf32, #tpu.memory_space<vmem>>, %arg6: memref<1x16xf32, #tpu.memory_space<vmem>>) attributes {dimension_semantics = [#tpu.dimension_semantics<parallel>], iteration_bounds = array<i64: 1>, scalar_prefetch = 0 : i64, scratch_operands = 0 : i64, tpu.core_type = #tpu.core_type<tc>, window_params = [{transform_indices = @transform_0, window_bounds = array<i64: 16, 32>}, {pipeline_mode = #tpu.pipeline_mode<synchronous>, transform_indices = @transform_1, window_bounds = array<i64: 32, 64>}, {pipeline_mode = #tpu.pipeline_mode<synchronous>, transform_indices = @transform_2, window_bounds = array<i64: 1, 64>}, {pipeline_mode = #tpu.pipeline_mode<synchronous>, transform_indices = @transform_3, window_bounds = array<i64: 1, 64>}, {pipeline_mode = #tpu.pipeline_mode<synchronous>, transform_indices = @transform_4, window_bounds = array<i64: 1, 1>}, {transform_indices = @transform_5, window_bounds = array<i64: 1, 16>}]} {
    %c0 = arith.constant 0 : index
    %c0_0 = arith.constant 0 : index
    %0 = vector.load %arg1[%c0, %c0_0] : memref<16x32xbf16, #tpu.memory_space<vmem>>, vector<16x32xbf16>
    %c0_1 = arith.constant 0 : index
    %c0_2 = arith.constant 0 : index
    %1 = vector.load %arg2[%c0_1, %c0_2] : memref<32x64xbf16, #tpu.memory_space<vmem>>, vector<32x64xbf16>
    %cst = arith.constant dense<0.000000e+00> : vector<16x64xf32>
    %2 = tpu.matmul %0, %1, %cst {dimension_numbers = #tpu.dot_dimension_numbers<[1], [0], [0], [1], [0, 0, 1, 1], [], []>} : vector<16x32xbf16>, vector<32x64xbf16>, vector<16x64xf32> -> vector<16x64xf32>
    %c0_3 = arith.constant 0 : index
    %c0_4 = arith.constant 0 : index
    %3 = vector.load %arg3[%c0_3, %c0_4] : memref<1x64xf32, #tpu.memory_space<vmem>>, vector<1x64xf32>
    %4 = vector.broadcast %3 : vector<1x64xf32> to vector<16x64xf32>
    %5 = arith.addf %2, %4 : vector<16x64xf32>
    %cst_5 = arith.constant 1.000000e-01 : f32
    %6 = vector.broadcast %cst_5 : f32 to vector<16x64xf32>
    %7 = arith.mulf %6, %5 : vector<16x64xf32>
    %8 = arith.maximumf %5, %7 : vector<16x64xf32>
    %c0_6 = arith.constant 0 : index
    %c0_7 = arith.constant 0 : index
    %9 = vector.load %arg4[%c0_6, %c0_7] : memref<1x64xf32, #tpu.memory_space<vmem>>, vector<1x64xf32>
    %cst_8 = arith.constant dense<0.000000e+00> : vector<1x16xf32>
    %10 = tpu.matmul %9, %8, %cst_8 {dimension_numbers = #tpu.dot_dimension_numbers<[1], [1], [0], [0], [0, 0, 1, 0], [], []>} : vector<1x64xf32>, vector<16x64xf32>, vector<1x16xf32> -> vector<1x16xf32>
    %c0_9 = arith.constant 0 : index
    %c0_10 = arith.constant 0 : index
    %11 = vector.load %arg5[%c0_9, %c0_10] : memref<1x1xf32, #tpu.memory_space<vmem>>, vector<1x1xf32>
    %12 = vector.broadcast %11 : vector<1x1xf32> to vector<1x16xf32>
    %13 = arith.addf %10, %12 : vector<1x16xf32>
    %c0_11 = arith.constant 0 : index
    %c0_12 = arith.constant 0 : index
    %14 = vector.load %arg6[%c0_11, %c0_12] : memref<1x16xf32, #tpu.memory_space<vmem>>, vector<1x16xf32>
    tpu.vector_store %arg6[%c0_11, %c0_12], %13 {strides = array<i32>} : memref<1x16xf32, #tpu.memory_space<vmem>>, vector<1x16xf32>,
    return
  }
  func.func @transform_0(%arg0: i32) -> (i32, i32) {
    %c0_i32 = arith.constant 0 : i32
    %c0_i32_0 = arith.constant 0 : i32
    return %arg0, %c0_i32 : i32, i32
  }
  func.func @transform_1(%arg0: i32) -> (i32, i32) {
    %c0_i32 = arith.constant 0 : i32
    %c0_i32_0 = arith.constant 0 : i32
    %c0_i32_1 = arith.constant 0 : i32
    return %c0_i32, %c0_i32_0 : i32, i32
  }
  func.func @transform_2(%arg0: i32) -> (i32, i32) {
    %c0_i32 = arith.constant 0 : i32
    %c0_i32_0 = arith.constant 0 : i32
    %c0_i32_1 = arith.constant 0 : i32
    return %c0_i32, %c0_i32_0 : i32, i32
  }
  func.func @transform_3(%arg0: i32) -> (i32, i32) {
    %c0_i32 = arith.constant 0 : i32
    %c0_i32_0 = arith.constant 0 : i32
    %c0_i32_1 = arith.constant 0 : i32
    return %c0_i32, %c0_i32_0 : i32, i32
  }
  func.func @transform_4(%arg0: i32) -> (i32, i32) {
    %c0_i32 = arith.constant 0 : i32
    %c0_i32_0 = arith.constant 0 : i32
    %c0_i32_1 = arith.constant 0 : i32
    return %c0_i32, %c0_i32_0 : i32, i32
  }
  func.func @transform_5(%arg0: i32) -> (i32, i32) {
    %c0_i32 = arith.constant 0 : i32
    %c0_i32_0 = arith.constant 0 : i32
    return %c0_i32, %arg0 : i32, i32
  }
}

</mosaic_0001>

<llo_original>
// kernel: tpu_custom_call.1
$region0: #{tpu_custom_call.1}
  #allocation0 [shape = 'u32[]', space=smem, size = 0x4, offset = 0x4, fixed_abs, tag = 'smem constant byte address 0x4 - core index']
  #allocation1 [shape = 'u32[144,128]{1,0:T(1,128)}', space=vmem, size = 0x12000, scoped, tag = 'internal scratch']
  #allocation2 [shape = 'f32[1,1]{1,0:T(1,128)S(1)}', space=vmem, size = 0x200, scoped, tag = 'scoped memory for tpu_custom_call.1']
  %s0 = inlined_call_operand.hbm [shape: bf16[16,32], index: 0, kind: input, shape index: {}]
  %s1 = inlined_call_operand.hbm [shape: bf16[32,64], index: 1, kind: input, shape index: {}]
  %s2 = inlined_call_operand.vmem [shape: f32[1,64], index: 2, kind: input, shape index: {}]
  %s3 = inlined_call_operand.vmem [shape: f32[1,64], index: 3, kind: input, shape index: {}]
  %s4 = inlined_call_operand.<no memory space> [shape: f32[1,1], index: 4, kind: input, shape index: {}]
  %s5 = inlined_call_operand.hbm [shape: f32[1,16], index: 5, kind: output, shape index: {}]
  %s6 = sld [smem:[#allocation0]]
  $region38: #{tpu_custom_call.1} parent=0
    _
  %s8 = ssub.s32 1, %s6
  %s9 = scalar_select 0, %s8, %s6
  %v10 = vstv %s4
  %11 = vst [vmem:[#allocation2] sm:$0x1] %v10
  $region1: #{tpu_custom_call.1} parent=0
    #allocation3 [shape = 'u8[4096]{0}', space=vmem, size = 0x1000, scoped, tag = 'input window, operand 0, single buffered']
    #allocation4 [shape = 's32[1]{0}', space=sflag, size = 0x4, scoped, tag = 'scoped memory for tpu_custom_call.1']
    #allocation5 [shape = 's32[1]{0}', space=sflag, size = 0x4, scoped, tag = 'scoped memory for tpu_custom_call.1']
    #allocation6 [shape = 'u8[8192]{0}', space=vmem, size = 0x2000, scoped, tag = 'input window, operand 1, single buffered']
    #allocation7 [shape = 's32[1]{0}', space=sflag, size = 0x4, scoped, tag = 'scoped memory for tpu_custom_call.1']
    #allocation8 [shape = 'u8[512]{0}', space=vmem, size = 0x400, scoped, tag = 'output window, operand 0, single buffered']
    %12 = vsyncpa [#allocation4], 0
    %13 = vsyncpa [#allocation7], 0
    %14 = vsyncpa [#allocation5], 0
    // Predicated region
    $region2: #{tpu_custom_call.1} parent=1 // pred_check
      _
    $region3: #{tpu_custom_call.1} parent=1 // pred_check_branch
      %16 = sbr.rel (0) target = $region5
    $region4: #{tpu_custom_call.1} parent=1 // pred_region
      %s18 = ssub.s32 128, 128
      %19 = vsyncadd [#allocation4], %s18
      %s20 = sshll.u32 [#allocation3], 4
      %s21 = int_to_ptr.vmem [resolvable:$true] %s20
      %26 = dma.hbm_to_vmem [thread:$0]  %s0, 128, %s21, [#allocation4], 64, 64, 4
    $region5: #{tpu_custom_call.1} parent=1 // pred_fallthru
      _
    // Predicated region
    $region6: #{tpu_custom_call.1} parent=1 // pred_check
      _
    $region7: #{tpu_custom_call.1} parent=1 // pred_check_branch
      %28 = sbr.rel (0) target = $region9
    $region8: #{tpu_custom_call.1} parent=1 // pred_region
      %s30 = ssub.s32 256, 256
      %31 = vsyncadd [#allocation7], %s30
      %s32 = sshll.u32 [#allocation6], 4
      %s33 = int_to_ptr.vmem [resolvable:$true] %s32
      %38 = dma.hbm_to_vmem [thread:$0]  %s1, 256, %s33, [#allocation7], 64, 64, 4
    $region9: #{tpu_custom_call.1} parent=1 // pred_fallthru
      _
    // Predicated region
    $region10: #{tpu_custom_call.1} parent=1 // pred_check
      _
    $region11: #{tpu_custom_call.1} parent=1 // pred_check_branch
      %40 = sbr.rel (0) target = $region13
    $region12: #{tpu_custom_call.1} parent=1 // pred_region
      _
    $region13: #{tpu_custom_call.1} parent=1 // pred_fallthru
      _
    // Predicated region
    $region14: #{tpu_custom_call.1} parent=1 // pred_check
      _
    $region15: #{tpu_custom_call.1} parent=1 // pred_check_branch
      %42 = sbr.rel (0) target = $region17
    $region16: #{tpu_custom_call.1} parent=1 // pred_region
      _
    $region17: #{tpu_custom_call.1} parent=1 // pred_fallthru
      _
    // Predicated region
    $region18: #{tpu_custom_call.1} parent=1 // pred_check
      _
    $region19: #{tpu_custom_call.1} parent=1 // pred_check_branch
      %44 = sbr.rel (0) target = $region21
    $region20: #{tpu_custom_call.1} parent=1 // pred_region
      _
    $region21: #{tpu_custom_call.1} parent=1 // pred_fallthru
      _
    // Predicated region
    $region22: #{tpu_custom_call.1} parent=1 // pred_check
      _
    $region23: #{tpu_custom_call.1} parent=1 // pred_check_branch
      %46 = sbr.rel (0) target = $region25
    $region24: #{tpu_custom_call.1} parent=1 // pred_region
      %47 = dma.done [#allocation4], 128
    $region25: #{tpu_custom_call.1} parent=1 // pred_fallthru
      _
    // Predicated region
    $region26: #{tpu_custom_call.1} parent=1 // pred_check
      _
    $region27: #{tpu_custom_call.1} parent=1 // pred_check_branch
      %49 = sbr.rel (0) target = $region29
    $region28: #{tpu_custom_call.1} parent=1 // pred_region
      %50 = dma.done [#allocation7], 256
    $region29: #{tpu_custom_call.1} parent=1 // pred_fallthru
      _
    %v52 = vld [vmem:[#allocation3] sm:$0xf]
    %v53 = vld [vmem:[#allocation3 + $0x4] sm:$0xf]
    %v54 = vld [vmem:[#allocation6] sm:$0xf]
    %v55 = vld [vmem:[#allocation6 + $0x4] sm:$0xf]
    %v56 = vld [vmem:[#allocation6 + $0x8] sm:$0xf]
    %v57 = vld [vmem:[#allocation6 + $0xc] sm:$0xf]
    %v58 = vld [vmem:[%s2] sm:$0x1]
    %v60 = vlaneseq
    %v61 = vshrl.u32 %v60, 7
    %v62 = vsub.s32 0, %v61
    %v63 = vrot.slane %v58, %v62
    %v67 = vunpack.c.l.b16 %v52
    %v68 = vunpack.c.l.b16 %v53
    %v69 = vpack.c.b16 %v68, %v67
    %v74 = vunpack.c.l.b16 %v54
    %v75 = vunpack.c.l.b16 %v55
    %v76 = vunpack.c.l.b16 %v56
    %v77 = vunpack.c.l.b16 %v57
    %v78 = vpack.c.b16 %v75, %v74
    %v79 = vpack.c.b16 %v77, %v76
    %vm82 = vcmask 261120
    %v84 = vsel %vm82, %v69, 0
    %86 = vmatprep.subr.bf16.mxu0 0
    %87 = vmatpush1.bf16.msra.mxu0 0
    %88 = vmatprep.subr.bf16.mxu0 0
    %89 = vmatpush1.bf16.msra.mxu0 0
    %90 = vmatprep.subr.bf16.mxu0 0
    %91 = vmatpush1.bf16.msra.mxu0 0
    %92 = vmatprep.subr.bf16.mxu0 0
    %93 = vmatpush1.bf16.msra.mxu0 0
    %94 = vmatprep.subr.bf16.mxu0 0
    %95 = vmatpush1.bf16.msra.mxu0 0
    %96 = vmatprep.subr.bf16.mxu0 0
    %97 = vmatpush1.bf16.msra.mxu0 0
    %98 = vmatprep.subr.bf16.mxu0 0
    %99 = vmatpush1.bf16.msra.mxu0 %v79
    %100 = vmatprep.subr.bf16.mxu0 0
    %101 = vmatpush1.bf16.msra.mxu0 %v78
    %102 = vmatprep.subr.bf16.mxu0 0
    %103 = vmatpush2.bf16.msra.mxu0 0
    %104 = vmatprep.subr.bf16.mxu0 0
    %105 = vmatpush2.bf16.msra.mxu0 0
    %106 = vmatprep.subr.bf16.mxu0 0
    %107 = vmatpush2.bf16.msra.mxu0 0
    %108 = vmatprep.subr.bf16.mxu0 0
    %109 = vmatpush2.bf16.msra.mxu0 0
    %110 = vmatprep.subr.bf16.mxu0 0
    %111 = vmatpush2.bf16.msra.mxu0 0
    %112 = vmatprep.subr.bf16.mxu0 0
    %113 = vmatpush2.bf16.msra.mxu0 0
    %114 = vmatprep.subr.bf16.mxu0 0
    %115 = vmatpush2.bf16.msra.mxu0 0
    %116 = vmatprep.subr.bf16.mxu0 0
    %117 = vmatpush2.bf16.msra.mxu0 0
    %118 = vmatprep.mubr.bf16.mxu0 0
    %119 = vmatmul.mubr.bf16.gmra.mxu0 %v84
    %v120 = vpop.f32.mrf.mxu0
    %v121 = vadd.f32 %v63, %v120
    %v122 = vpop.f32.mrf.mxu0
    %v123 = vpop.f32.mrf.mxu0
    %v124 = vadd.f32 %v63, %v123
    %v125 = vpop.f32.mrf.mxu0
    %126 = vdwg.mxu0
    %v127 = vmul.f32 %v121, 0.1
    %v128 = vmul.f32 %v124, 0.1
    %v129 = vmax.f32 %v121, %v127
    %v130 = vmax.f32 %v124, %v128
    %v131 = vld [vmem:[%s3] sm:$0x1]
    %v132 = vld [vmem:[#allocation2] sm:$0x1]
    %134 = vset.pattern.permute.xlu0 0
    %135 = vperm.xlu0 %134, %v132
    %v136 = vpop.permute.xlu0 %135
    %v138 = vlaneseq
    %v139 = vshrl.u32 %v138, 7
    %v140 = vsub.s32 0, %v139
    %v141 = vrot.slane %v136, %v140
    %vm142 = vcmask 523264
    %v144 = vsel %vm142, %v131, 0
    %v147 = vsel %vm142, %v129, 0
    %v150 = vsel %vm142, %v130, 0
    %152 = vmatprep.subr.mxu0 0.0
    %153 = vmatpush1.xpose.msra.mxu0 0.0
    %154 = vmatprep.subr.mxu0 0.0
    %155 = vmatpush1.xpose.msra.mxu0 0.0
    %156 = vmatprep.subr.mxu0 0.0
    %157 = vmatpush1.xpose.msra.mxu0 0.0
    %158 = vmatprep.subr.mxu0 0.0
    %159 = vmatpush1.xpose.msra.mxu0 0.0
    %160 = vmatprep.subr.mxu0 0.0
    %161 = vmatpush1.xpose.msra.mxu0 0.0
    %162 = vmatprep.subr.mxu0 0.0
    %163 = vmatpush1.xpose.msra.mxu0 0.0
    %164 = vmatprep.subr.mxu0 0.0
    %165 = vmatpush1.xpose.msra.mxu0 0.0
    %166 = vmatprep.subr.mxu0 0.0
    %167 = vmatpush1.xpose.msra.mxu0 0.0
    %168 = vmatprep.subr.mxu0 0.0
    %169 = vmatpush1.xpose.msra.mxu0 0.0
    %170 = vmatprep.subr.mxu0 0.0
    %171 = vmatpush1.xpose.msra.mxu0 0.0
    %172 = vmatprep.subr.mxu0 0.0
    %173 = vmatpush1.xpose.msra.mxu0 0.0
    %174 = vmatprep.subr.mxu0 0.0
    %175 = vmatpush1.xpose.msra.mxu0 0.0
    %176 = vmatprep.subr.mxu0 0.0
    %177 = vmatpush1.xpose.msra.mxu0 0.0
    %178 = vmatprep.subr.mxu0 0.0
    %179 = vmatpush1.xpose.msra.mxu0 0.0
    %180 = vmatprep.subr.mxu0 0.0
    %181 = vmatpush1.xpose.msra.mxu0 %v150
    %182 = vmatprep.subr.mxu0 0.0
    %183 = vmatpush1.xpose.msra.mxu0 %v147
    %184 = vmatprep.subr.mxu0 0.0
    %185 = vmatpush2.xpose.msra.mxu0 0.0
    %186 = vmatprep.subr.mxu0 0.0
    %187 = vmatpush2.xpose.msra.mxu0 0.0
    %188 = vmatprep.subr.mxu0 0.0
    %189 = vmatpush2.xpose.msra.mxu0 0.0
    %190 = vmatprep.subr.mxu0 0.0
    %191 = vmatpush2.xpose.msra.mxu0 0.0
    %192 = vmatprep.subr.mxu0 0.0
    %193 = vmatpush2.xpose.msra.mxu0 0.0
    %194 = vmatprep.subr.mxu0 0.0
    %195 = vmatpush2.xpose.msra.mxu0 0.0
    %196 = vmatprep.subr.mxu0 0.0
    %197 = vmatpush2.xpose.msra.mxu0 0.0
    %198 = vmatprep.subr.mxu0 0.0
    %199 = vmatpush2.xpose.msra.mxu0 0.0
    %200 = vmatprep.subr.mxu0 0.0
    %201 = vmatpush2.xpose.msra.mxu0 0.0
    %202 = vmatprep.subr.mxu0 0.0
    %203 = vmatpush2.xpose.msra.mxu0 0.0
    %204 = vmatprep.subr.mxu0 0.0
    %205 = vmatpush2.xpose.msra.mxu0 0.0
    %206 = vmatprep.subr.mxu0 0.0
    %207 = vmatpush2.xpose.msra.mxu0 0.0
    %208 = vmatprep.subr.mxu0 0.0
    %209 = vmatpush2.xpose.msra.mxu0 0.0
    %210 = vmatprep.subr.mxu0 0.0
    %211 = vmatpush2.xpose.msra.mxu0 0.0
    %212 = vmatprep.subr.mxu0 0.0
    %213 = vmatpush2.xpose.msra.mxu0 0.0
    %214 = vmatprep.subr.mxu0 0.0
    %215 = vmatpush2.xpose.msra.mxu0 0.0
    %216 = vmatprep.mubr.f32.mxu0 0.0
    %217 = vmatmul.mubr.f32.gmra.mxu0 %v144
    %v218 = vpop.f32.mrf.mxu0
    %v219 = vadd.f32 %v141, %v218
    %v220 = vpop.f32.mrf.mxu0
    %221 = vdwg.mxu0
    %vm222 = vcmask 122880
    %223 = vst.msk [vmem:[#allocation8] sm:$0x1] %vm222, %v219
    // Predicated region
    $region30: #{tpu_custom_call.1} parent=1 // pred_check
      _
    $region31: #{tpu_custom_call.1} parent=1 // pred_check_branch
      %225 = sbr.rel (0) target = $region33
    $region32: #{tpu_custom_call.1} parent=1 // pred_region
      %s227 = ssub.s32 16, 16
      %228 = vsyncadd [#allocation5], %s227
      %s230 = sshll.u32 [#allocation8], 4
      %s231 = int_to_ptr.vmem [resolvable:$true] %s230
      %233 = dma.vmem_to_hbm [thread:$0]  %s231, 16, %s5, [#allocation5]
    $region33: #{tpu_custom_call.1} parent=1 // pred_fallthru
      _
    // Predicated region
    $region34: #{tpu_custom_call.1} parent=1 // pred_check
      _
    $region35: #{tpu_custom_call.1} parent=1 // pred_check_branch
      %235 = sbr.rel (0) target = $region37
    $region36: #{tpu_custom_call.1} parent=1 // pred_region
      %236 = dma.done [#allocation5], 16
    $region37: #{tpu_custom_call.1} parent=1 // pred_fallthru
      _
    %237 = vsyncpa [#allocation4], 1
    %238 = vsyncpa [#allocation7], 1
    %239 = vsyncpa [#allocation5], 1

</llo_original>
